<compile_context>
chip_gen: v7x
topology: tpu7x:2x2x1
jax: 0.10.0
libtpu: 0.0.40
codegen_flags: <defaults>
</compile_context>

<pallas_src>
import functools

import jax
import jax.numpy as jnp
from jax import lax
from jax.experimental import pallas as pl
from jax.experimental.pallas import tpu as pltpu

LANE = 128   # lane-dense slab width for the packed (new_hidden[1] | value) output


def _leaky_relu(x, slope=0.01):
    return jnp.where(x > 0, x, slope * x)


def _policy_kernel(obs_ref, h0p_ref, h1p_ref,
                   wcat_ref, bcat_ref, w1p_ref, b1p_ref, wc2_ref, bc2_ref,
                   prob_ref, h0n_ref, packed_ref,
                   *, n_actions, hidden):
    obs = obs_ref[...]

    # --- fused obs-side matmul: [actor block0 | critic layer1] -> (TB, 2H) ---
    zcat = (jnp.dot(obs, wcat_ref[...], preferred_element_type=jnp.float32)
            + bcat_ref[...])
    z0 = zcat[:, :hidden]          # actor block0 pre-activation (128-aligned slice)
    zc = zcat[:, hidden:]          # critic layer1 pre-activation

    # new_hidden[0] = relu(leaky_relu(z0)) == relu(z0)
    h0n_ref[...] = jnp.maximum(z0, 0.0)

    # critic head: LeakyReLU, then 128->1 on VPU multiply + XLU lane reduce.
    hc = _leaky_relu(zc)
    val = (jnp.sum(hc * wc2_ref[...], axis=-1, keepdims=True)
           + bc2_ref[0, 0])                                     # (TB, 1)

    # actor block1 on previous hidden; W1/b1 zero-padded to 128 lanes so the
    # matmul result is lane-dense and padded lanes are exactly 0 after relu.
    z1 = (jnp.dot(h0p_ref[...], w1p_ref[...],
                  preferred_element_type=jnp.float32) + b1p_ref[...])
    h1n = jnp.maximum(z1, 0.0)                                  # (TB, LANE)

    # pack the state value into lane `n_actions` of the otherwise-zero padding
    # so new_hidden[1] and state_values share one lane-dense 128-wide store.
    lane = lax.broadcasted_iota(jnp.int32, h1n.shape, 1)
    packed_ref[...] = jnp.where(lane == n_actions, val, h1n)

    # softmax over the previous last hidden activation, computed directly on
    # the narrow (TB, A) block read from HBM (no wrapper-side NEG_FILL pad).
    h1p = h1p_ref[...]
    m = jnp.max(h1p, axis=-1, keepdims=True)
    e = jnp.exp(h1p - m)
    prob_ref[...] = e / jnp.sum(e, axis=-1, keepdims=True)      # exact normalization


def pack_params(params):
    """One-time weight layout plumbing.  Call OUTSIDE the per-step hot path."""
    H = params["w0"].shape[1]
    A = params["w1"].shape[1]
    assert H % LANE == 0, "hidden must be a multiple of 128 (aligned zcat slices)"
    assert 0 < A < LANE, "n_actions (+ value lane) must fit one 128-lane slab"
    return dict(
        wcat=jnp.concatenate([params["w0"], params["wc1"]], axis=1),   # (D, 2H)
        bcat=jnp.concatenate([params["b0"], params["bc1"]], axis=1),   # (1, 2H)
        w1p=jnp.pad(params["w1"], ((0, 0), (0, LANE - A))),            # (H, 128)
        b1p=jnp.pad(params["b1"], ((0, 0), (0, LANE - A))),            # (1, 128)
        wc2_row=params["wc2"].reshape(1, H),                           # (1, H)
        bc2=params["bc2"].reshape(1, 1),                               # (1, 1) SMEM
    )


@jax.jit
def policy_delay_ind_forward(obs, h0_prev, h1_prev, packed_params):
    """obs: [B, D]; h0_prev: [B, H]; h1_prev: [B, A]; packed_params: pack_params(...)."""
    B, D = obs.shape
    H = h0_prev.shape[1]
    A = h1_prev.shape[1]
    assert H % LANE == 0 and A < LANE

    # Batch tile: whole batch for tiny B; otherwise >= 2 grid steps so v7x's
    # second TensorCore gets work, capped at 1024 rows per step.
    if B <= 8:
        TB = B
    else:
        TB = min(1024, ((B + 1) // 2 + 7) // 8 * 8)
    grid = (pl.cdiv(B, TB),)
    # When B % TB != 0, the tail step computes on garbage rows; those results
    # are discarded by the pipeline writeback (non-finite values are harmless).

    # Explicit scoped-VMEM budget: double-buffered activation tiles + resident
    # weights, x2 margin, floored at 32 MiB, capped at v7x's 64 MiB per core.
    act_lanes = D + H + A + A + H + LANE                  # in + out lanes per row
    wgt_elems = D * 2 * H + 2 * H + H * LANE + LANE + H + 1
    vmem_limit = min(64 * 1024 * 1024,
                     max(32 * 1024 * 1024,
                         2 * 4 * (2 * TB * act_lanes + 2 * wgt_elems)))

    kernel = functools.partial(_policy_kernel, n_actions=A, hidden=H)

    def row(shape):   # batch-tiled operand (double-buffered by the pipeline)
        return pl.BlockSpec(shape, lambda i: (i, 0))

    def rep(shape):   # VMEM-resident weight (same block every step -> one DMA)
        return pl.BlockSpec(shape, lambda i: (0, 0))

    p = packed_params
    prob, h0_new, packed = pl.pallas_call(
        kernel,
        grid=grid,
        in_specs=[
            row((TB, D)),                                       # obs
            row((TB, H)),                                       # h0_prev
            row((TB, A)),                                       # h1_prev (narrow)
            rep((D, 2 * H)),                                    # fused W0|Wc1
            rep((1, 2 * H)),                                    # fused b0|bc1
            rep((H, LANE)),                                     # W1 (zero-padded)
            rep((1, LANE)),                                     # b1 (zero-padded)
            rep((1, H)),                                        # Wc2 as a row
            pl.BlockSpec(memory_space=pltpu.MemorySpace.SMEM),  # bc2 scalar
        ],
        out_specs=(
            row((TB, A)),       # action_prob (narrow: tiny writeback)
            row((TB, H)),       # new_hidden[0] (lane-dense)
            row((TB, LANE)),    # new_hidden[1] | state value, packed lane-dense
        ),
        out_shape=(
            jax.ShapeDtypeStruct((B, A), jnp.float32),
            jax.ShapeDtypeStruct((B, H), jnp.float32),
            jax.ShapeDtypeStruct((B, LANE), jnp.float32),
        ),
        compiler_params=pltpu.CompilerParams(
            dimension_semantics=("parallel",),
            vmem_limit_bytes=vmem_limit),
    )(obs, h0_prev, h1_prev, p["wcat"], p["bcat"], p["w1p"], p["b1p"],
      p["wc2_row"], p["bc2"])

    h1_new = packed[:, :A]
    state_values = packed[:, A:A + 1]
    return prob, state_values, [h0_new, h1_new]


def init_params(key, obs_dim, n_actions, hidden=128):
    """Deterministic synthetic parameters (PyTorch-Linear-like uniform init)."""
    ks = jax.random.split(key, 8)

    def lin(kw, kb, fan_in, fan_out):
        bound = 1.0 / jnp.sqrt(fan_in)
        w = jax.random.uniform(kw, (fan_in, fan_out), jnp.float32, -bound, bound)
        b = jax.random.uniform(kb, (1, fan_out), jnp.float32, -bound, bound)
        return w, b

    w0, b0 = lin(ks[0], ks[1], obs_dim, hidden)
    w1, b1 = lin(ks[2], ks[3], hidden, n_actions)
    wc1, bc1 = lin(ks[4], ks[5], obs_dim, hidden)
    wc2, bc2 = lin(ks[6], ks[7], hidden, 1)
    return dict(w0=w0, b0=b0, w1=w1, b1=b1, wc1=wc1, bc1=bc1, wc2=wc2, bc2=bc2)


def reference_forward(obs, h0_prev, h1_prev, p):
    """Pure-JAX reference mirroring the PyTorch module's forward()."""
    h0_new = jnp.maximum(_leaky_relu(obs @ p["w0"] + p["b0"]), 0.0)
    h1_new = jnp.maximum(h0_prev @ p["w1"] + p["b1"], 0.0)
    action_prob = jax.nn.softmax(h1_prev, axis=-1)
    state_values = _leaky_relu(obs @ p["wc1"] + p["bc1"]) @ p["wc2"] + p["bc2"]
    return action_prob, state_values, [h0_new, h1_new]


if __name__ == "__main__":
    key = jax.random.PRNGKey(0)
    batch, obs_dim, n_actions, hidden = 2, 8, 4, 128

    k_param, k_obs = jax.random.split(key)
    params = init_params(k_param, obs_dim, n_actions, hidden)
    packed_params = pack_params(params)          # one-time, outside the hot path
    obs = jax.random.normal(k_obs, (batch, obs_dim), jnp.float32)

    # hidden_acts from get_init_hidden(obs) — plain-JAX glue, not the kernel.
    h0_prev = _leaky_relu(obs @ params["w0"] + params["b0"])
    h1_prev = h0_prev @ params["w1"] + params["b1"]

    action_prob, state_values, new_hidden = policy_delay_ind_forward(
        obs, h0_prev, h1_prev, packed_params)
    jax.block_until_ready((action_prob, state_values, new_hidden))

    # correctness check vs pure-JAX reference (exact softmax divide in-kernel).
    ref_prob, ref_val, ref_hidden = reference_forward(obs, h0_prev, h1_prev, params)
    assert jnp.allclose(action_prob, ref_prob, atol=1e-5)
    assert jnp.allclose(state_values, ref_val, atol=1e-4)
    assert jnp.allclose(new_hidden[0], ref_hidden[0], atol=1e-4)
    assert jnp.allclose(new_hidden[1], ref_hidden[1], atol=1e-4)

    print("KERNEL_OK")
</pallas_src>

<mosaic_0001>
module attributes {stable_mosaic.version = 11 : i64} {
  func.func @_policy_kernel(%arg0: i32, %arg1: memref<2x8xf32, #tpu.memory_space<vmem>>, %arg2: memref<2x128xf32, #tpu.memory_space<vmem>>, %arg3: memref<2x4xf32, #tpu.memory_space<vmem>>, %arg4: memref<8x256xf32, #tpu.memory_space<vmem>>, %arg5: memref<1x256xf32, #tpu.memory_space<vmem>>, %arg6: memref<128x128xf32, #tpu.memory_space<vmem>>, %arg7: memref<1x128xf32, #tpu.memory_space<vmem>>, %arg8: memref<1x128xf32, #tpu.memory_space<vmem>>, %arg9: memref<1x1xf32, #tpu.memory_space<smem>>, %arg10: memref<2x4xf32, #tpu.memory_space<vmem>>, %arg11: memref<2x128xf32, #tpu.memory_space<vmem>>, %arg12: memref<2x128xf32, #tpu.memory_space<vmem>>) attributes {dimension_semantics = [#tpu.dimension_semantics<parallel>], iteration_bounds = array<i64: 1>, scalar_prefetch = 0 : i64, scratch_operands = 0 : i64, tpu.core_type = #tpu.core_type<tc>, window_params = [{transform_indices = @transform_0, window_bounds = array<i64: 2, 8>}, {transform_indices = @transform_1, window_bounds = array<i64: 2, 128>}, {transform_indices = @transform_2, window_bounds = array<i64: 2, 4>}, {pipeline_mode = #tpu.pipeline_mode<synchronous>, transform_indices = @transform_3, window_bounds = array<i64: 8, 256>}, {pipeline_mode = #tpu.pipeline_mode<synchronous>, transform_indices = @transform_4, window_bounds = array<i64: 1, 256>}, {pipeline_mode = #tpu.pipeline_mode<synchronous>, transform_indices = @transform_5, window_bounds = array<i64: 128, 128>}, {pipeline_mode = #tpu.pipeline_mode<synchronous>, transform_indices = @transform_6, window_bounds = array<i64: 1, 128>}, {pipeline_mode = #tpu.pipeline_mode<synchronous>, transform_indices = @transform_7, window_bounds = array<i64: 1, 128>}, {transform_indices = @transform_8, window_bounds = array<i64: 1, 1>}, {transform_indices = @transform_9, window_bounds = array<i64: 2, 4>}, {transform_indices = @transform_10, window_bounds = array<i64: 2, 128>}, {transform_indices = @transform_11, window_bounds = array<i64: 2, 128>}]} {
    %c0 = arith.constant 0 : index
    %c0_0 = arith.constant 0 : index
    %0 = vector.load %arg1[%c0, %c0_0] : memref<2x8xf32, #tpu.memory_space<vmem>>, vector<2x8xf32>
    %c0_1 = arith.constant 0 : index
    %c0_2 = arith.constant 0 : index
    %1 = vector.load %arg4[%c0_1, %c0_2] : memref<8x256xf32, #tpu.memory_space<vmem>>, vector<8x256xf32>
    %cst = arith.constant dense<0.000000e+00> : vector<2x256xf32>
    %2 = tpu.matmul %0, %1, %cst {dimension_numbers = #tpu.dot_dimension_numbers<[1], [0], [0], [1], [0, 0, 1, 1], [], []>} : vector<2x8xf32>, vector<8x256xf32>, vector<2x256xf32> -> vector<2x256xf32>
    %c0_3 = arith.constant 0 : index
    %c0_4 = arith.constant 0 : index
    %3 = vector.load %arg5[%c0_3, %c0_4] : memref<1x256xf32, #tpu.memory_space<vmem>>, vector<1x256xf32>
    %4 = vector.broadcast %3 : vector<1x256xf32> to vector<2x256xf32>
    %5 = arith.addf %2, %4 : vector<2x256xf32>
    %6 = vector.extract_strided_slice %5 {offsets = [0, 0], sizes = [2, 128], strides = [1, 1]} : vector<2x256xf32> to vector<2x128xf32>
    %7 = vector.extract_strided_slice %5 {offsets = [0, 128], sizes = [2, 128], strides = [1, 1]} : vector<2x256xf32> to vector<2x128xf32>
    %cst_5 = arith.constant 0.000000e+00 : f32
    %8 = vector.broadcast %cst_5 : f32 to vector<2x128xf32>
    %9 = arith.maximumf %6, %8 : vector<2x128xf32>
    %c0_6 = arith.constant 0 : index
    %c0_7 = arith.constant 0 : index
    %10 = vector.load %arg11[%c0_6, %c0_7] : memref<2x128xf32, #tpu.memory_space<vmem>>, vector<2x128xf32>
    tpu.vector_store %arg11[%c0_6, %c0_7], %9 {strides = array<i32>} : memref<2x128xf32, #tpu.memory_space<vmem>>, vector<2x128xf32>,
    %cst_8 = arith.constant 0.000000e+00 : f32
    %11 = vector.broadcast %cst_8 : f32 to vector<2x128xf32>
    %12 = arith.cmpf ogt, %7, %11 : vector<2x128xf32>
    %cst_9 = arith.constant 0.00999999977 : f32
    %13 = vector.broadcast %cst_9 : f32 to vector<2x128xf32>
    %14 = arith.mulf %13, %7 : vector<2x128xf32>
    %15 = arith.select %12, %7, %14 : vector<2x128xi1>, vector<2x128xf32>
    %c0_10 = arith.constant 0 : index
    %c0_11 = arith.constant 0 : index
    %16 = vector.load %arg8[%c0_10, %c0_11] : memref<1x128xf32, #tpu.memory_space<vmem>>, vector<1x128xf32>
    %17 = vector.broadcast %16 : vector<1x128xf32> to vector<2x128xf32>
    %18 = arith.mulf %15, %17 : vector<2x128xf32>
    %cst_12 = arith.constant dense<0.000000e+00> : vector<2xf32>
    %19 = vector.multi_reduction <add>, %18, %cst_12 [1] : vector<2x128xf32> to vector<2xf32>
    %20 = vector.shape_cast %19 : vector<2xf32> to vector<2x1xf32>
    %c0_13 = arith.constant 0 : index
    %c0_14 = arith.constant 0 : index
    %21 = memref.load %arg9[%c0_13, %c0_14] : memref<1x1xf32, #tpu.memory_space<smem>>
    %22 = vector.broadcast %21 : f32 to vector<2x1xf32>
    %23 = arith.addf %20, %22 : vector<2x1xf32>
    %c0_15 = arith.constant 0 : index
    %c0_16 = arith.constant 0 : index
    %24 = vector.load %arg2[%c0_15, %c0_16] : memref<2x128xf32, #tpu.memory_space<vmem>>, vector<2x128xf32>
    %c0_17 = arith.constant 0 : index
    %c0_18 = arith.constant 0 : index
    %25 = vector.load %arg6[%c0_17, %c0_18] : memref<128x128xf32, #tpu.memory_space<vmem>>, vector<128x128xf32>
    %cst_19 = arith.constant dense<0.000000e+00> : vector<2x128xf32>
    %26 = tpu.matmul %24, %25, %cst_19 {dimension_numbers = #tpu.dot_dimension_numbers<[1], [0], [0], [1], [0, 0, 1, 1], [], []>} : vector<2x128xf32>, vector<128x128xf32>, vector<2x128xf32> -> vector<2x128xf32>
    %c0_20 = arith.constant 0 : index
    %c0_21 = arith.constant 0 : index
    %27 = vector.load %arg7[%c0_20, %c0_21] : memref<1x128xf32, #tpu.memory_space<vmem>>, vector<1x128xf32>
    %28 = vector.broadcast %27 : vector<1x128xf32> to vector<2x128xf32>
    %29 = arith.addf %26, %28 : vector<2x128xf32>
    %cst_22 = arith.constant 0.000000e+00 : f32
    %30 = vector.broadcast %cst_22 : f32 to vector<2x128xf32>
    %31 = arith.maximumf %29, %30 : vector<2x128xf32>
    %32 = tpu.iota {dimensions = array<i32: 1>} : vector<2x128xi32>
    %c4_i32 = arith.constant 4 : i32
    %33 = vector.broadcast %c4_i32 : i32 to vector<2x128xi32>
    %34 = arith.cmpi eq, %32, %33 : vector<2x128xi32>
    %35 = vector.shape_cast %23 : vector<2x1xf32> to vector<2x1xf32>
    %36 = vector.broadcast %35 : vector<2x1xf32> to vector<2x128xf32>
    %37 = arith.select %34, %36, %31 : vector<2x128xi1>, vector<2x128xf32>
    %c0_23 = arith.constant 0 : index
    %c0_24 = arith.constant 0 : index
    %38 = vector.load %arg12[%c0_23, %c0_24] : memref<2x128xf32, #tpu.memory_space<vmem>>, vector<2x128xf32>
    tpu.vector_store %arg12[%c0_23, %c0_24], %37 {strides = array<i32>} : memref<2x128xf32, #tpu.memory_space<vmem>>, vector<2x128xf32>,
    %c0_25 = arith.constant 0 : index
    %c0_26 = arith.constant 0 : index
    %39 = vector.load %arg3[%c0_25, %c0_26] : memref<2x4xf32, #tpu.memory_space<vmem>>, vector<2x4xf32>
    %cst_27 = arith.constant dense<0xFF800000> : vector<2xf32>
    %40 = vector.multi_reduction <maximumf>, %39, %cst_27 [1] : vector<2x4xf32> to vector<2xf32>
    %41 = vector.shape_cast %40 : vector<2xf32> to vector<2x1xf32>
    %42 = vector.broadcast %41 : vector<2x1xf32> to vector<2x4xf32>
    %43 = arith.subf %39, %42 : vector<2x4xf32>
    %44 = math.exp %43 : vector<2x4xf32>
    %cst_28 = arith.constant dense<0.000000e+00> : vector<2xf32>
    %45 = vector.multi_reduction <add>, %44, %cst_28 [1] : vector<2x4xf32> to vector<2xf32>
    %46 = vector.shape_cast %45 : vector<2xf32> to vector<2x1xf32>
    %47 = vector.broadcast %46 : vector<2x1xf32> to vector<2x4xf32>
    %48 = arith.divf %44, %47 : vector<2x4xf32>
    %c0_29 = arith.constant 0 : index
    %c0_30 = arith.constant 0 : index
    %49 = vector.load %arg10[%c0_29, %c0_30] : memref<2x4xf32, #tpu.memory_space<vmem>>, vector<2x4xf32>
    tpu.vector_store %arg10[%c0_29, %c0_30], %48 {strides = array<i32>} : memref<2x4xf32, #tpu.memory_space<vmem>>, vector<2x4xf32>,
    return
  }
  func.func @transform_0(%arg0: i32) -> (i32, i32) {
    %c0_i32 = arith.constant 0 : i32
    %c0_i32_0 = arith.constant 0 : i32
    return %arg0, %c0_i32 : i32, i32
  }
  func.func @transform_1(%arg0: i32) -> (i32, i32) {
    %c0_i32 = arith.constant 0 : i32
    %c0_i32_0 = arith.constant 0 : i32
    return %arg0, %c0_i32 : i32, i32
  }
  func.func @transform_2(%arg0: i32) -> (i32, i32) {
    %c0_i32 = arith.constant 0 : i32
    %c0_i32_0 = arith.constant 0 : i32
    return %arg0, %c0_i32 : i32, i32
  }
  func.func @transform_3(%arg0: i32) -> (i32, i32) {
    %c0_i32 = arith.constant 0 : i32
    %c0_i32_0 = arith.constant 0 : i32
    %c0_i32_1 = arith.constant 0 : i32
    return %c0_i32, %c0_i32_0 : i32, i32
  }
  func.func @transform_4(%arg0: i32) -> (i32, i32) {
    %c0_i32 = arith.constant 0 : i32
    %c0_i32_0 = arith.constant 0 : i32
    %c0_i32_1 = arith.constant 0 : i32
    return %c0_i32, %c0_i32_0 : i32, i32
  }
  func.func @transform_5(%arg0: i32) -> (i32, i32) {
    %c0_i32 = arith.constant 0 : i32
    %c0_i32_0 = arith.constant 0 : i32
    %c0_i32_1 = arith.constant 0 : i32
    return %c0_i32, %c0_i32_0 : i32, i32
  }
  func.func @transform_6(%arg0: i32) -> (i32, i32) {
    %c0_i32 = arith.constant 0 : i32
    %c0_i32_0 = arith.constant 0 : i32
    %c0_i32_1 = arith.constant 0 : i32
    return %c0_i32, %c0_i32_0 : i32, i32
  }
  func.func @transform_7(%arg0: i32) -> (i32, i32) {
    %c0_i32 = arith.constant 0 : i32
    %c0_i32_0 = arith.constant 0 : i32
    %c0_i32_1 = arith.constant 0 : i32
    return %c0_i32, %c0_i32_0 : i32, i32
  }
  func.func @transform_8(%arg0: i32) -> (i32, i32) {
    %c0_i32 = arith.constant 0 : i32
    %c0_i32_0 = arith.constant 0 : i32
    %c0_i32_1 = arith.constant 0 : i32
    return %c0_i32, %c0_i32_0 : i32, i32
  }
  func.func @transform_9(%arg0: i32) -> (i32, i32) {
    %c0_i32 = arith.constant 0 : i32
    %c0_i32_0 = arith.constant 0 : i32
    return %arg0, %c0_i32 : i32, i32
  }
  func.func @transform_10(%arg0: i32) -> (i32, i32) {
    %c0_i32 = arith.constant 0 : i32
    %c0_i32_0 = arith.constant 0 : i32
    return %arg0, %c0_i32 : i32, i32
  }
  func.func @transform_11(%arg0: i32) -> (i32, i32) {
    %c0_i32 = arith.constant 0 : i32
    %c0_i32_0 = arith.constant 0 : i32
    return %arg0, %c0_i32 : i32, i32
  }
}

</mosaic_0001>

<llo_original>
// kernel: policy_delay_ind_forward.1
$region0: #{policy_delay_ind_forward.1}
  #allocation0 [shape = 'u32[]', space=smem, size = 0x4, offset = 0x4, fixed_abs, tag = 'smem constant byte address 0x4 - core index']
  #allocation1 [shape = 'u32[144,128]{1,0:T(1,128)}', space=vmem, size = 0x12000, scoped, tag = 'internal scratch']
  #allocation2 [shape = 'f32[1,1]{1,0:T(1,128)S(6)}', space=smem, size = 0x200, scoped, tag = 'scoped memory for policy_delay_ind_forward.1']
  %s0 = inlined_call_operand.vmem [shape: f32[2,8], index: 0, kind: input, shape index: {}]
  %s1 = inlined_call_operand.vmem [shape: f32[2,128], index: 1, kind: input, shape index: {}]
  %s2 = inlined_call_operand.vmem [shape: f32[2,4], index: 2, kind: input, shape index: {}]
  %s3 = inlined_call_operand.vmem [shape: f32[8,256], index: 3, kind: input, shape index: {}]
  %s4 = inlined_call_operand.vmem [shape: f32[1,256], index: 4, kind: input, shape index: {}]
  %s5 = inlined_call_operand.hbm [shape: f32[128,128], index: 5, kind: input, shape index: {}]
  %s6 = inlined_call_operand.vmem [shape: f32[1,128], index: 6, kind: input, shape index: {}]
  %s7 = inlined_call_operand.vmem [shape: f32[1,128], index: 7, kind: input, shape index: {}]
  %s8 = inlined_call_operand.<no memory space> [shape: f32[1,1], index: 8, kind: input, shape index: {}]
  %s9 = inlined_call_operand.hbm [shape: f32[2,4], index: 9, kind: output, shape index: {0}]
  %s10 = inlined_call_operand.hbm [shape: f32[2,128], index: 10, kind: output, shape index: {1}]
  %s11 = inlined_call_operand.vmem [shape: f32[2,128], index: 11, kind: output, shape index: {2}]
  %12 = xla_tuple %s9, %s10, %s11
  %s13 = sld [smem:[#allocation0]]
  $region66: #{policy_delay_ind_forward.1} parent=0
    _
  %s15 = ssub.s32 1, %s13
  %s16 = scalar_select 0, %s15, %s13
  %17 = sst [smem:[#allocation2]] %s8
  $region1: #{policy_delay_ind_forward.1} parent=0
    #allocation3 [shape = 'u8[65536]{0}', space=vmem, size = 0x10000, scoped, tag = 'input window, operand 5, single buffered']
    #allocation4 [shape = 's32[1]{0}', space=sflag, size = 0x4, scoped, tag = 'scoped memory for policy_delay_ind_forward.1']
    #allocation5 [shape = 's32[1]{0}', space=sflag, size = 0x4, scoped, tag = 'scoped memory for policy_delay_ind_forward.1']
    #allocation6 [shape = 'u8[1024]{0}', space=vmem, size = 0x400, scoped, tag = 'output window, operand 0, single buffered']
    #allocation7 [shape = 'u8[1024]{0}', space=vmem, size = 0x400, scoped, tag = 'output window, operand 1, single buffered']
    #allocation8 [shape = 's32[1]{0}', space=sflag, size = 0x4, scoped, tag = 'scoped memory for policy_delay_ind_forward.1']
    %18 = vsyncpa [#allocation4], 0
    %19 = vsyncpa [#allocation5], 0
    %20 = vsyncpa [#allocation8], 0
    // Predicated region
    $region2: #{policy_delay_ind_forward.1} parent=1 // pred_check
      _
    $region3: #{policy_delay_ind_forward.1} parent=1 // pred_check_branch
      %22 = sbr.rel (0) target = $region5
    $region4: #{policy_delay_ind_forward.1} parent=1 // pred_region
      _
    $region5: #{policy_delay_ind_forward.1} parent=1 // pred_fallthru
      _
    // Predicated region
    $region6: #{policy_delay_ind_forward.1} parent=1 // pred_check
      _
    $region7: #{policy_delay_ind_forward.1} parent=1 // pred_check_branch
      %24 = sbr.rel (0) target = $region9
    $region8: #{policy_delay_ind_forward.1} parent=1 // pred_region
      _
    $region9: #{policy_delay_ind_forward.1} parent=1 // pred_fallthru
      _
    // Predicated region
    $region10: #{policy_delay_ind_forward.1} parent=1 // pred_check
      _
    $region11: #{policy_delay_ind_forward.1} parent=1 // pred_check_branch
      %26 = sbr.rel (0) target = $region13
    $region12: #{policy_delay_ind_forward.1} parent=1 // pred_region
      _
    $region13: #{policy_delay_ind_forward.1} parent=1 // pred_fallthru
      _
    // Predicated region
    $region14: #{policy_delay_ind_forward.1} parent=1 // pred_check
      _
    $region15: #{policy_delay_ind_forward.1} parent=1 // pred_check_branch
      %28 = sbr.rel (0) target = $region17
    $region16: #{policy_delay_ind_forward.1} parent=1 // pred_region
      _
    $region17: #{policy_delay_ind_forward.1} parent=1 // pred_fallthru
      _
    // Predicated region
    $region18: #{policy_delay_ind_forward.1} parent=1 // pred_check
      _
    $region19: #{policy_delay_ind_forward.1} parent=1 // pred_check_branch
      %30 = sbr.rel (0) target = $region21
    $region20: #{policy_delay_ind_forward.1} parent=1 // pred_region
      _
    $region21: #{policy_delay_ind_forward.1} parent=1 // pred_fallthru
      _
    // Predicated region
    $region22: #{policy_delay_ind_forward.1} parent=1 // pred_check
      _
    $region23: #{policy_delay_ind_forward.1} parent=1 // pred_check_branch
      %32 = sbr.rel (0) target = $region25
    $region24: #{policy_delay_ind_forward.1} parent=1 // pred_region
      %s34 = ssub.s32 2048, 2048
      %35 = vsyncadd [#allocation4], %s34
      %s36 = sshll.u32 [#allocation3], 4
      %s37 = int_to_ptr.vmem [resolvable:$true] %s36
      %42 = dma.hbm_to_vmem [thread:$0]  %s5, 2048, %s37, [#allocation4], 128, 128, 8
    $region25: #{policy_delay_ind_forward.1} parent=1 // pred_fallthru
      _
    // Predicated region
    $region26: #{policy_delay_ind_forward.1} parent=1 // pred_check
      _
    $region27: #{policy_delay_ind_forward.1} parent=1 // pred_check_branch
      %44 = sbr.rel (0) target = $region29
    $region28: #{policy_delay_ind_forward.1} parent=1 // pred_region
      _
    $region29: #{policy_delay_ind_forward.1} parent=1 // pred_fallthru
      _
    // Predicated region
    $region30: #{policy_delay_ind_forward.1} parent=1 // pred_check
      _
    $region31: #{policy_delay_ind_forward.1} parent=1 // pred_check_branch
      %46 = sbr.rel (0) target = $region33
    $region32: #{policy_delay_ind_forward.1} parent=1 // pred_region
      _
    $region33: #{policy_delay_ind_forward.1} parent=1 // pred_fallthru
      _
    // Predicated region
    $region34: #{policy_delay_ind_forward.1} parent=1 // pred_check
      _
    $region35: #{policy_delay_ind_forward.1} parent=1 // pred_check_branch
      %48 = sbr.rel (0) target = $region37
    $region36: #{policy_delay_ind_forward.1} parent=1 // pred_region
      _
    $region37: #{policy_delay_ind_forward.1} parent=1 // pred_fallthru
      _
    // Predicated region
    $region38: #{policy_delay_ind_forward.1} parent=1 // pred_check
      _
    $region39: #{policy_delay_ind_forward.1} parent=1 // pred_check_branch
      %50 = sbr.rel (0) target = $region41
    $region40: #{policy_delay_ind_forward.1} parent=1 // pred_region
      %51 = dma.done [#allocation4], 2048
    $region41: #{policy_delay_ind_forward.1} parent=1 // pred_fallthru
      _
    %v52 = vld [vmem:[%s0] sm:$0x3]
    %v53 = vld [vmem:[%s3] sm:$0xff]
    %v54 = vld [vmem:[%s3 + $0x8] sm:$0xff]
    %v55 = vld [vmem:[%s4] sm:$0x3]
    %v57 = vlaneseq
    %v58 = vshrl.u32 %v57, 7
    %v59 = vsub.s32 0, %v58
    %v60 = vrot.slane %v55, %v59
    %v61 = vlaneseq
    %v62 = vshrl.u32 %v61, 7
    %v63 = vsub.s32 1, %v62
    %v64 = vrot.slane %v55, %v63
    %vm67 = vcmask 64512
    %v69 = vsel %vm67, %v52, 0
    %71 = vmatprep.subr.mxu0 %v54
    %72 = vmatpush1.msra.mxu0 %v53
    %73 = vmatprep.subr.mxu0 0.0
    %74 = vmatpush1.msra.mxu0 0.0
    %75 = vmatprep.subr.mxu0 0.0
    %76 = vmatpush1.msra.mxu0 0.0
    %77 = vmatprep.subr.mxu0 0.0
    %78 = vmatpush1.msra.mxu0 0.0
    %79 = vmatprep.subr.mxu0 0.0
    %80 = vmatpush1.msra.mxu0 0.0
    %81 = vmatprep.subr.mxu0 0.0
    %82 = vmatpush1.msra.mxu0 0.0
    %83 = vmatprep.subr.mxu0 0.0
    %84 = vmatpush1.msra.mxu0 0.0
    %85 = vmatprep.subr.mxu0 0.0
    %86 = vmatpush1.msra.mxu0 0.0
    %87 = vmatprep.subr.mxu0 0.0
    %88 = vmatpush1.msra.mxu0 0.0
    %89 = vmatprep.subr.mxu0 0.0
    %90 = vmatpush1.msra.mxu0 0.0
    %91 = vmatprep.subr.mxu0 0.0
    %92 = vmatpush1.msra.mxu0 0.0
    %93 = vmatprep.subr.mxu0 0.0
    %94 = vmatpush1.msra.mxu0 0.0
    %95 = vmatprep.subr.mxu0 0.0
    %96 = vmatpush1.msra.mxu0 0.0
    %97 = vmatprep.subr.mxu0 0.0
    %98 = vmatpush1.msra.mxu0 0.0
    %99 = vmatprep.subr.mxu0 0.0
    %100 = vmatpush1.msra.mxu0 0.0
    %101 = vmatprep.subr.mxu0 0.0
    %102 = vmatpush1.msra.mxu0 0.0
    %103 = vmatprep.subr.mxu0 0.0
    %104 = vmatpush1.msra.mxu0 0.0
    %105 = vmatprep.subr.mxu0 0.0
    %106 = vmatpush1.msra.mxu0 0.0
    %107 = vmatprep.subr.mxu0 0.0
    %108 = vmatpush1.msra.mxu0 0.0
    %109 = vmatprep.subr.mxu0 0.0
    %110 = vmatpush1.msra.mxu0 0.0
    %111 = vmatprep.subr.mxu0 0.0
    %112 = vmatpush1.msra.mxu0 0.0
    %113 = vmatprep.subr.mxu0 0.0
    %114 = vmatpush1.msra.mxu0 0.0
    %115 = vmatprep.subr.mxu0 0.0
    %116 = vmatpush1.msra.mxu0 0.0
    %117 = vmatprep.subr.mxu0 0.0
    %118 = vmatpush1.msra.mxu0 0.0
    %119 = vmatprep.subr.mxu0 0.0
    %120 = vmatpush1.msra.mxu0 0.0
    %121 = vmatprep.subr.mxu0 0.0
    %122 = vmatpush1.msra.mxu0 0.0
    %123 = vmatprep.subr.mxu0 0.0
    %124 = vmatpush1.msra.mxu0 0.0
    %125 = vmatprep.subr.mxu0 0.0
    %126 = vmatpush1.msra.mxu0 0.0
    %127 = vmatprep.subr.mxu0 0.0
    %128 = vmatpush1.msra.mxu0 0.0
    %129 = vmatprep.subr.mxu0 0.0
    %130 = vmatpush1.msra.mxu0 0.0
    %131 = vmatprep.subr.mxu0 0.0
    %132 = vmatpush1.msra.mxu0 0.0
    %133 = vmatprep.subr.mxu0 0.0
    %134 = vmatpush1.msra.mxu0 0.0
    %135 = vmatprep.mubr.f32.mxu0 0.0
    %136 = vmatmul.mubr.f32.gmra.mrb[0].mxu0 %v69
    %v137 = vpop.f32.mrb[0].mxu0
    %v138 = vadd.f32 %v60, %v137
    %v139 = vpop.f32.mrb[0].mxu0
    %v140 = vadd.f32 %v64, %v139
    %141 = vdwg.mxu0
    %v142 = vmax.f32 %v138, 0.0
    %143 = vst [vmem:[#allocation7] sm:$0x3] %v142
    %vm144 = vcmp.gt.f32.partialorder %v140, 0.0
    %v145 = vmul.f32 %v140, 0.01
    %v146 = vsel %vm144, %v140, %v145
    %v147 = vld [vmem:[%s7] sm:$0x1]
    %v149 = vlaneseq
    %v150 = vshrl.u32 %v149, 7
    %v151 = vsub.s32 0, %v150
    %v152 = vrot.slane %v147, %v151
    %v154 = vmul.f32 %v146, %v152
    %vm155 = vcmask 1041408
    %v156 = vsel %vm155, %v154, 0.0
    %157 = vadd.xlane.f32.xlu0 %v156
    %v158 = vpop.xlane.xlu0 %157
    %s159 = sld [smem:[#allocation2]]
    %v160 = vstv %s159
    %v161 = vadd.f32 %v158, %v160
    %v162 = vld [vmem:[%s1] sm:$0x3]
    %v163 = vld [vmem:[#allocation3] sm:$0xff]
    %v164 = vld [vmem:[#allocation3 + $0x8] sm:$0xff]
    %v165 = vld [vmem:[#allocation3 + $0x10] sm:$0xff]
    %v166 = vld [vmem:[#allocation3 + $0x18] sm:$0xff]
    %v167 = vld [vmem:[#allocation3 + $0x20] sm:$0xff]
    %v168 = vld [vmem:[#allocation3 + $0x28] sm:$0xff]
    %v169 = vld [vmem:[#allocation3 + $0x30] sm:$0xff]
    %v170 = vld [vmem:[#allocation3 + $0x38] sm:$0xff]
    %v171 = vld [vmem:[#allocation3 + $0x40] sm:$0xff]
    %v172 = vld [vmem:[#allocation3 + $0x48] sm:$0xff]
    %v173 = vld [vmem:[#allocation3 + $0x50] sm:$0xff]
    %v174 = vld [vmem:[#allocation3 + $0x58] sm:$0xff]
    %v175 = vld [vmem:[#allocation3 + $0x60] sm:$0xff]
    %v176 = vld [vmem:[#allocation3 + $0x68] sm:$0xff]
    %v177 = vld [vmem:[#allocation3 + $0x70] sm:$0xff]
    %v178 = vld [vmem:[#allocation3 + $0x78] sm:$0xff]
    %v179 = vld [vmem:[%s6] sm:$0x1]
    %v181 = vlaneseq
    %v182 = vshrl.u32 %v181, 7
    %v183 = vsub.s32 0, %v182
    %v184 = vrot.slane %v179, %v183
    %186 = vmatprep.subr.mxu0 0.0
    %187 = vmatpush1.msra.mxu0 %v163
    %188 = vmatprep.subr.mxu0 0.0
    %189 = vmatpush1.msra.mxu0 %v164
    %190 = vmatprep.subr.mxu0 0.0
    %191 = vmatpush1.msra.mxu0 %v165
    %192 = vmatprep.subr.mxu0 0.0
    %193 = vmatpush1.msra.mxu0 %v166
    %194 = vmatprep.subr.mxu0 0.0
    %195 = vmatpush1.msra.mxu0 %v167
    %196 = vmatprep.subr.mxu0 0.0
    %197 = vmatpush1.msra.mxu0 %v168
    %198 = vmatprep.subr.mxu0 0.0
    %199 = vmatpush1.msra.mxu0 %v169
    %200 = vmatprep.subr.mxu0 0.0
    %201 = vmatpush1.msra.mxu0 %v170
    %202 = vmatprep.subr.mxu0 0.0
    %203 = vmatpush1.msra.mxu0 %v171
    %204 = vmatprep.subr.mxu0 0.0
    %205 = vmatpush1.msra.mxu0 %v172
    %206 = vmatprep.subr.mxu0 0.0
    %207 = vmatpush1.msra.mxu0 %v173
    %208 = vmatprep.subr.mxu0 0.0
    %209 = vmatpush1.msra.mxu0 %v174
    %210 = vmatprep.subr.mxu0 0.0
    %211 = vmatpush1.msra.mxu0 %v175
    %212 = vmatprep.subr.mxu0 0.0
    %213 = vmatpush1.msra.mxu0 %v176
    %214 = vmatprep.subr.mxu0 0.0
    %215 = vmatpush1.msra.mxu0 %v177
    %216 = vmatprep.subr.mxu0 0.0
    %217 = vmatpush1.msra.mxu0 %v178
    %218 = vmatprep.subr.mxu0 0.0
    %219 = vmatpush1.msra.mxu0 0.0
    %220 = vmatprep.subr.mxu0 0.0
    %221 = vmatpush1.msra.mxu0 0.0
    %222 = vmatprep.subr.mxu0 0.0
    %223 = vmatpush1.msra.mxu0 0.0
    %224 = vmatprep.subr.mxu0 0.0
    %225 = vmatpush1.msra.mxu0 0.0
    %226 = vmatprep.subr.mxu0 0.0
    %227 = vmatpush1.msra.mxu0 0.0
    %228 = vmatprep.subr.mxu0 0.0
    %229 = vmatpush1.msra.mxu0 0.0
    %230 = vmatprep.subr.mxu0 0.0
    %231 = vmatpush1.msra.mxu0 0.0
    %232 = vmatprep.subr.mxu0 0.0
    %233 = vmatpush1.msra.mxu0 0.0
    %234 = vmatprep.subr.mxu0 0.0
    %235 = vmatpush1.msra.mxu0 0.0
    %236 = vmatprep.subr.mxu0 0.0
    %237 = vmatpush1.msra.mxu0 0.0
    %238 = vmatprep.subr.mxu0 0.0
    %239 = vmatpush1.msra.mxu0 0.0
    %240 = vmatprep.subr.mxu0 0.0
    %241 = vmatpush1.msra.mxu0 0.0
    %242 = vmatprep.subr.mxu0 0.0
    %243 = vmatpush1.msra.mxu0 0.0
    %244 = vmatprep.subr.mxu0 0.0
    %245 = vmatpush1.msra.mxu0 0.0
    %246 = vmatprep.subr.mxu0 0.0
    %247 = vmatpush1.msra.mxu0 0.0
    %248 = vmatprep.subr.mxu0 0.0
    %249 = vmatpush1.msra.mxu0 0.0
    %250 = vmatprep.mubr.f32.mxu0 0.0
    %251 = vmatmul.mubr.f32.gmra.mrb[0].mxu0 %v162
    %v252 = vpop.f32.mrb[0].mxu0
    %v253 = vadd.f32 %v184, %v252
    %v254 = vpop.f32.mrb[0].mxu0
    %255 = vdwg.mxu0
    %v256 = vmax.f32 %v253, 0.0
    %v257 = vlaneseq
    %v258 = vand.u32 %v257, 127
    %vm259 = vcmp.eq.s32.totalorder %v258, 4
    %v260 = vsel %vm259, %v161, %v256
    %261 = vst [vmem:[%s11] sm:$0x3] %v260
    %v262 = vld [vmem:[%s2] sm:$0x3]
    %vm263 = vcmask 25600
    %v264 = vsel %vm263, %v262, -inf
    %265 = vmax.xlane.f32.xlu0 %v264
    %v266 = vpop.xlane.xlu0 %265
    %v267 = vsub.f32 %v262, %v266
    %v268 = vmul.f32 %v267, 1.442695
    %v269 = vpow.pop %v268
    %v270 = vsel %vm263, %v269, 0.0
    %271 = vadd.xlane.f32.xlu0 %v270
    %v272 = vpop.xlane.xlu0 %271
    %v273 = vrcp.pop %v272
    %v274 = vmul.f32 %v269, %v273
    %275 = vst.msk [vmem:[#allocation6] sm:$0x3] %vm263, %v274
    // Predicated region
    $region42: #{policy_delay_ind_forward.1} parent=1 // pred_check
      _
    $region43: #{policy_delay_ind_forward.1} parent=1 // pred_check_branch
      %277 = sbr.rel (0) target = $region45
    $region44: #{policy_delay_ind_forward.1} parent=1 // pred_region
      %s279 = ssub.s32 32, 32
      %280 = vsyncadd [#allocation5], %s279
      %s282 = sshll.u32 [#allocation6], 4
      %s283 = int_to_ptr.vmem [resolvable:$true] %s282
      %285 = dma.vmem_to_hbm [thread:$0]  %s283, 32, %s9, [#allocation5]
    $region45: #{policy_delay_ind_forward.1} parent=1 // pred_fallthru
      _
    // Predicated region
    $region46: #{policy_delay_ind_forward.1} parent=1 // pred_check
      _
    $region47: #{policy_delay_ind_forward.1} parent=1 // pred_check_branch
      %287 = sbr.rel (0) target = $region49
    $region48: #{policy_delay_ind_forward.1} parent=1 // pred_region
      %s289 = ssub.s32 32, 32
      %290 = vsyncadd [#allocation8], %s289
      %s292 = sshll.u32 [#allocation7], 4
      %s293 = int_to_ptr.vmem [resolvable:$true] %s292
      %295 = dma.vmem_to_hbm [thread:$0]  %s293, 32, %s10, [#allocation8]
    $region49: #{policy_delay_ind_forward.1} parent=1 // pred_fallthru
      _
    // Predicated region
    $region50: #{policy_delay_ind_forward.1} parent=1 // pred_check
      _
    $region51: #{policy_delay_ind_forward.1} parent=1 // pred_check_branch
      %297 = sbr.rel (0) target = $region53
    $region52: #{policy_delay_ind_forward.1} parent=1 // pred_region
      _
    $region53: #{policy_delay_ind_forward.1} parent=1 // pred_fallthru
      _
    // Predicated region
    $region54: #{policy_delay_ind_forward.1} parent=1 // pred_check
      _
    $region55: #{policy_delay_ind_forward.1} parent=1 // pred_check_branch
      %299 = sbr.rel (0) target = $region57
    $region56: #{policy_delay_ind_forward.1} parent=1 // pred_region
      %300 = dma.done [#allocation5], 32
    $region57: #{policy_delay_ind_forward.1} parent=1 // pred_fallthru
      _
    // Predicated region
    $region58: #{policy_delay_ind_forward.1} parent=1 // pred_check
      _
    $region59: #{policy_delay_ind_forward.1} parent=1 // pred_check_branch
      %302 = sbr.rel (0) target = $region61
    $region60: #{policy_delay_ind_forward.1} parent=1 // pred_region
      %303 = dma.done [#allocation8], 32
    $region61: #{policy_delay_ind_forward.1} parent=1 // pred_fallthru
      _
    // Predicated region
    $region62: #{policy_delay_ind_forward.1} parent=1 // pred_check
      _
    $region63: #{policy_delay_ind_forward.1} parent=1 // pred_check_branch
      %305 = sbr.rel (0) target = $region65
    $region64: #{policy_delay_ind_forward.1} parent=1 // pred_region
      _
    $region65: #{policy_delay_ind_forward.1} parent=1 // pred_fallthru
      _
    %306 = vsyncpa [#allocation4], 1
    %307 = vsyncpa [#allocation5], 1
    %308 = vsyncpa [#allocation8], 1

</llo_original>
